<compile_context>
chip_gen: v7x
topology: tpu7x:2x2x1
jax: 0.10.0
libtpu: 0.0.40
codegen_flags: <defaults>
</compile_context>

<pallas_src>
import jax
import jax.numpy as jnp
from jax.experimental import pallas as pl
from jax.experimental.pallas import tpu as pltpu


_LANE = 512                              # lane-dense slab width (multiple of 128)
_MIN_BLOCKS = 8                          # keep the grid shardable across v7x's 2 TCs
_VMEM_LIMIT = 32 * 1024 * 1024           # 2 out-buffers x 8 MiB max + headroom
_SMALL_WHOLE_BYTES = 2 * 1024 * 1024     # whole-array (no-pad/no-slice) path threshold
_SUBLANE = {4: 8, 2: 16, 1: 32}          # native sublane packing per itemsize


def _zero_kernel(o_ref):
    # Write-only: no input ref, so the drop branch never reads HBM.
    o_ref[...] = jnp.zeros_like(o_ref)


def _cdiv(a, b):
    return -(-a // b)


def _round_up(a, b):
    return _cdiv(a, b) * b


def _pick_block_bytes():
    # v7x (64 MiB VMEM / ~3.2 TB/s HBM) wants bigger blocks to amortize the
    # ~0.35 us per-grid-step overhead; v5e/v6e (128 MiB VMEM) are fine at 4 MiB.
    try:
        vmem = int(pltpu.get_tpu_info().vmem_capacity_bytes)
    except Exception:
        vmem = 128 * 1024 * 1024
    return (8 * 1024 * 1024) if vmem <= 64 * 1024 * 1024 else (4 * 1024 * 1024)


def _zeros_tiled(total_units, sublane, dtype, itemsize):
    """Write-only lane-dense (rows, _LANE) zero slab, tiled along rows."""
    unit_elems = sublane * _LANE
    target_units = max(1, _pick_block_bytes() // (unit_elems * itemsize))
    units_per_block = min(target_units, total_units)
    # Keep >= _MIN_BLOCKS grid steps on large tensors so "parallel" can shard
    # across both v7x TensorCores (single-TC v5e/v6e are unaffected).
    if total_units >= _MIN_BLOCKS:
        units_per_block = min(units_per_block, total_units // _MIN_BLOCKS)
    units_per_block = max(1, units_per_block)
    # Make the grid cover the slab exactly (largest divisor <= target).  Cheap
    # trace-time loop; pathological factorizations just fall back to smaller
    # blocks (correct, merely slower, and essentially never hit by video dims).
    while total_units % units_per_block:
        units_per_block -= 1

    rows = total_units * sublane
    tile_rows = units_per_block * sublane
    grid = (total_units // units_per_block,)

    return pl.pallas_call(
        _zero_kernel,
        out_shape=jax.ShapeDtypeStruct((rows, _LANE), dtype),
        grid=grid,
        out_specs=pl.BlockSpec((tile_rows, _LANE), lambda i: (i, 0)),
        compiler_params=pltpu.CompilerParams(
            dimension_semantics=("parallel",),
            vmem_limit_bytes=_VMEM_LIMIT,
        ),
        cost_estimate=pl.CostEstimate(
            flops=0, transcendentals=0, bytes_accessed=rows * _LANE * itemsize),
    )()


def _zeros_via_pallas(shape, dtype):
    """All-zeros array of `shape`/`dtype` produced by a write-only Pallas kernel."""
    n = 1
    for d in shape:
        n *= d
    itemsize = jnp.dtype(dtype).itemsize
    if itemsize not in _SUBLANE:
        # TODO(synk): 64-bit dtypes are not natively tiled on TPU; reject
        # explicitly instead of silently mis-tiling them.
        raise NotImplementedError(f"random_nullify: unsupported itemsize {itemsize}")
    sublane = _SUBLANE[itemsize]
    unit_elems = sublane * _LANE

    # (a) Small ragged shapes: single whole-array block -> no padding, no slice.
    #     Budget uses the *tile-padded* VMEM footprint, not the logical size.
    if len(shape) >= 2:
        lead = n // (shape[-2] * shape[-1])
        padded_vmem = (lead * _round_up(shape[-2], sublane)
                       * _round_up(shape[-1], 128) * itemsize)
    else:
        padded_vmem = sublane * _round_up(max(n, 1), 128) * itemsize
    if n % unit_elems != 0 and padded_vmem <= _SMALL_WHOLE_BYTES:
        shape2 = shape if len(shape) >= 2 else (1, max(n, 1))
        out = pl.pallas_call(
            _zero_kernel,
            out_shape=jax.ShapeDtypeStruct(shape2, dtype),
            cost_estimate=pl.CostEstimate(
                flops=0, transcendentals=0, bytes_accessed=n * itemsize),
        )()
        return out.reshape(shape)

    # (b) Lane-dense tiled slab.  Exact multiples of one (sublane, _LANE) tile
    #     reshape back for free; only large ragged shapes pay a zero-slice, and
    #     only on the drop branch.
    n_units = _cdiv(n, unit_elems)
    out2 = _zeros_tiled(n_units, sublane, dtype, itemsize)
    padded_n = n_units * unit_elems
    flat = out2.reshape(-1)
    if padded_n != n:
        flat = flat[:n]
    return flat.reshape(shape)


def random_nullify(x, key, p: float = 0.1):
    """Pallas implementation of RandomNullify.forward.

    x   : array of any shape (NCHW video frames in practice)
    key : jax.random key used for the single Bernoulli decision
    p   : static Python float, probability of nullifying the whole tensor
    """
    if x.size == 0:
        return x
    p = float(p)
    if p <= 0.0:
        return x                                   # never nullified: zero HBM traffic

    def _drop(_):
        return _zeros_via_pallas(x.shape, x.dtype)  # write-only zero fill

    if p >= 1.0:
        return _drop(x)                            # always nullified, no read

    # One uniform draw (the torch.rand(1) of the reference); the keep branch is
    # a pure identity, so ~(1-p) of calls skip the Pallas pass entirely.
    u = jax.random.uniform(key, (), dtype=jnp.float32)
    return jax.lax.cond(u < jnp.float32(p), _drop, lambda t: t, x)


if __name__ == "__main__":
    root = jax.random.PRNGKey(0)
    k_data, k_draw_a, k_draw_b = jax.random.split(root, 3)

    # NCHW video-frame batch: N=2, C=4, H=16, W=16.
    x = jax.random.normal(k_data, (2, 4, 16, 16), dtype=jnp.float32)

    # Case 1: default p=0.1 through lax.cond (jitted) -- must match reference select.
    nullify = jax.jit(random_nullify, static_argnames=("p",))
    y = jax.block_until_ready(nullify(x, k_draw_a, p=0.1))
    u1 = jax.random.uniform(k_draw_a, (), dtype=jnp.float32)
    ref1 = jnp.where(u1 < 0.1, jnp.zeros_like(x), x)
    assert jnp.array_equal(y, ref1), "mismatch vs reference (p=0.1)"

    # Case 2: p=0.95 through lax.cond (likely the other side of the branch).
    y2 = jax.block_until_ready(nullify(x, k_draw_b, p=0.95))
    u2 = jax.random.uniform(k_draw_b, (), dtype=jnp.float32)
    ref2 = jnp.where(u2 < 0.95, jnp.zeros_like(x), x)
    assert jnp.array_equal(y2, ref2), "mismatch vs reference (p=0.95)"

    # Case 3: p=1.0 always nullifies (small shape -> whole-array zero-fill path).
    z = jax.block_until_ready(random_nullify(x, k_draw_b, p=1.0))
    assert jnp.array_equal(z, jnp.zeros_like(x)), "p=1.0 should zero everything"

    # Case 4: p=0.0 never nullifies -- exact pass-through.
    w = jax.block_until_ready(random_nullify(x, k_draw_b, p=0.0))
    assert jnp.array_equal(w, x), "p=0.0 should pass through unchanged"

    # Case 5: tile-aligned f32 shape exercises the tiled lane-dense kernel.
    xt = jax.random.normal(k_data, (2, 4, 32, 128), dtype=jnp.float32)
    zt = jax.block_until_ready(random_nullify(xt, k_draw_b, p=1.0))
    assert jnp.array_equal(zt, jnp.zeros_like(xt)), "tiled zero-fill failed"

    # Case 6: ragged bf16 shape (sublane=16, whole-array small path) + identity.
    xb = jax.random.normal(k_data, (3, 5, 7, 9), dtype=jnp.bfloat16)
    zb = jax.block_until_ready(random_nullify(xb, k_draw_b, p=1.0))
    assert jnp.array_equal(zb, jnp.zeros_like(xb)), "ragged bf16 zero-fill failed"
    wb = jax.block_until_ready(random_nullify(xb, k_draw_b, p=0.0))
    assert jnp.array_equal(wb, xb), "bf16 pass-through failed"

    print("KERNEL_OK")
</pallas_src>

<mosaic_0001>
module attributes {stable_mosaic.version = 11 : i64} {
  func.func @_zero_kernel(%arg0: memref<2x4x16x16xf32, #tpu.memory_space<vmem>>) attributes {dimension_semantics = [], scalar_prefetch = 0 : i64, scratch_operands = 0 : i64, tpu.core_type = #tpu.core_type<tc>} {
    %cst = arith.constant 0.000000e+00 : f32
    %0 = vector.broadcast %cst : f32 to vector<2x4x16x16xf32>
    %c0 = arith.constant 0 : index
    %c0_0 = arith.constant 0 : index
    %c0_1 = arith.constant 0 : index
    %c0_2 = arith.constant 0 : index
    %1 = vector.load %arg0[%c0, %c0_0, %c0_1, %c0_2] : memref<2x4x16x16xf32, #tpu.memory_space<vmem>>, vector<2x4x16x16xf32>
    tpu.vector_store %arg0[%c0, %c0_0, %c0_1, %c0_2], %0 {strides = array<i32>} : memref<2x4x16x16xf32, #tpu.memory_space<vmem>>, vector<2x4x16x16xf32>,
    return
  }
}

</mosaic_0001>

<llo_original>
// kernel: branch_1_fun.1
$region0: #{branch_1_fun.1}
  #allocation0 [shape = 'u32[]', space=smem, size = 0x4, offset = 0x4, fixed_abs, tag = 'smem constant byte address 0x4 - core index']
  #allocation1 [shape = 'u32[144,128]{1,0:T(1,128)}', space=vmem, size = 0x12000, scoped, tag = 'internal scratch']
  %s0 = inlined_call_operand.hbm [shape: f32[2,4,16,16], index: 0, kind: output, shape index: {}]
  %s1 = sld [smem:[#allocation0]]
  $region10: #{branch_1_fun.1} parent=0
    _
  %s3 = ssub.s32 1, %s1
  %s4 = scalar_select 0, %s3, %s1
  $region1: #{branch_1_fun.1} parent=0
    #allocation2 [shape = 'u8[65536]{0}', space=vmem, size = 0x10000, scoped, tag = 'output window, operand 0, single buffered']
    #allocation3 [shape = 's32[1]{0}', space=sflag, size = 0x4, scoped, tag = 'scoped memory for branch_1_fun.1']
    %5 = vsyncpa [#allocation3], 0
    %vm6 = vcmask 130048
    %7 = vst.msk [vmem:[#allocation2] sm:$0xff] %vm6, 0.0
    %8 = vst.msk [vmem:[#allocation2 + $0x8] sm:$0xff] %vm6, 0.0
    %9 = vst.msk [vmem:[#allocation2 + $0x10] sm:$0xff] %vm6, 0.0
    %10 = vst.msk [vmem:[#allocation2 + $0x18] sm:$0xff] %vm6, 0.0
    %11 = vst.msk [vmem:[#allocation2 + $0x20] sm:$0xff] %vm6, 0.0
    %12 = vst.msk [vmem:[#allocation2 + $0x28] sm:$0xff] %vm6, 0.0
    %13 = vst.msk [vmem:[#allocation2 + $0x30] sm:$0xff] %vm6, 0.0
    %14 = vst.msk [vmem:[#allocation2 + $0x38] sm:$0xff] %vm6, 0.0
    %15 = vst.msk [vmem:[#allocation2 + $0x40] sm:$0xff] %vm6, 0.0
    %16 = vst.msk [vmem:[#allocation2 + $0x48] sm:$0xff] %vm6, 0.0
    %17 = vst.msk [vmem:[#allocation2 + $0x50] sm:$0xff] %vm6, 0.0
    %18 = vst.msk [vmem:[#allocation2 + $0x58] sm:$0xff] %vm6, 0.0
    %19 = vst.msk [vmem:[#allocation2 + $0x60] sm:$0xff] %vm6, 0.0
    %20 = vst.msk [vmem:[#allocation2 + $0x68] sm:$0xff] %vm6, 0.0
    %21 = vst.msk [vmem:[#allocation2 + $0x70] sm:$0xff] %vm6, 0.0
    %22 = vst.msk [vmem:[#allocation2 + $0x78] sm:$0xff] %vm6, 0.0
    // Predicated region
    $region2: #{branch_1_fun.1} parent=1 // pred_check
      _
    $region3: #{branch_1_fun.1} parent=1 // pred_check_branch
      %24 = sbr.rel (0) target = $region5
    $region4: #{branch_1_fun.1} parent=1 // pred_region
      %s26 = ssub.s32 2048, 2048
      %27 = vsyncadd [#allocation3], %s26
      %s28 = sshll.u32 [#allocation2], 4
      %s29 = int_to_ptr.vmem [resolvable:$true] %s28
      %34 = dma.vmem_to_hbm [thread:$0]  %s29, 2048, %s0, [#allocation3], 128, 128, 8
    $region5: #{branch_1_fun.1} parent=1 // pred_fallthru
      _
    // Predicated region
    $region6: #{branch_1_fun.1} parent=1 // pred_check
      _
    $region7: #{branch_1_fun.1} parent=1 // pred_check_branch
      %36 = sbr.rel (0) target = $region9
    $region8: #{branch_1_fun.1} parent=1 // pred_region
      %37 = dma.done [#allocation3], 2048
    $region9: #{branch_1_fun.1} parent=1 // pred_fallthru
      _
    %38 = vsyncpa [#allocation3], 1

</llo_original>
